<compile_context>
chip_gen: v5e
topology: v5e:2x2
jax: 0.10.0
libtpu: 0.0.40
codegen_flags: <defaults>
</compile_context>

<pallas_src>
import functools

import jax
import jax.numpy as jnp
import numpy as np
from jax.experimental import pallas as pl
from jax.experimental.pallas import tpu as pltpu

LANE = 128
BIAS_ROWS = 8


def _round_up(n, m):
    return (n + m - 1) // m * m


# ----------------------------- Pallas kernel --------------------------------

def actor_kernel(x_ref, params_ref, noise_ref, o_ref, *, obs_pad, mxu_dtype):
    """One grid step evaluates PT member-pairs (= 2*PT population members).

    Slab row layout (last dim is the 128-lane axis; two members per slab —
    member A in hidden lanes [0:H] / output lanes [0:ACT], member B in hidden
    lanes [H:2H] / output lanes [64:64+ACT]):
      [0        , obs_pad )  W1^T  (A cols [0:H], B cols [H:2H])
      [obs_pad  , +128    )  W2^T  block-diagonal (A block / B block)
      [+128     , +256    )  W3^T  (A rows -> cols [0:ACT], B rows -> cols [64:64+ACT])
      [+256     , +264    )  biases: row0=b1, row1=b2, row2=b3, rows 3..7 zero
    All unassigned slab positions are exactly zero (load-bearing padding hygiene).
    """
    r1 = obs_pad
    r2 = r1 + LANE
    r3 = r2 + LANE

    x = x_ref[...]                                    # (B, obs_pad)  f32
    params = params_ref[...]                          # (R, 128)      f32
    noise = noise_ref[...].astype(jnp.float32)        # (PT, R, 128)  (upcast if bf16 slab)

    pt = noise.shape[0]
    bsz = x.shape[0]

    # perturbed params' = params + noise  (same packed layout -> one big add)
    pert = params[None, :, :] + noise                 # (PT, R, 128)  f32

    w1t = pert[:, 0:r1, :].astype(mxu_dtype)          # (PT, obs_pad, 128)
    w2t = pert[:, r1:r2, :].astype(mxu_dtype)         # (PT, 128, 128)
    w3t = pert[:, r2:r3, :].astype(mxu_dtype)         # (PT, 128, 128)
    b1 = pert[:, r3:r3 + 1, :]                        # (PT, 1, 128)  f32
    b2 = pert[:, r3 + 1:r3 + 2, :]
    b3 = pert[:, r3 + 2:r3 + 3, :]

    xb = jnp.broadcast_to(x.astype(mxu_dtype)[None], (pt, bsz, r1))

    # Stacked (over the member-pair axis) MXU matmuls, f32 accumulation;
    # bias add + tanh stay in f32 on the VPU/EUP.
    h1 = jnp.tanh(jnp.einsum('pbo,pok->pbk', xb, w1t,
                             preferred_element_type=jnp.float32) + b1)
    h2 = jnp.tanh(jnp.einsum('pbk,pkj->pbj', h1.astype(mxu_dtype), w2t,
                             preferred_element_type=jnp.float32) + b2)
    out = jnp.tanh(jnp.einsum('pbk,pkj->pbj', h2.astype(mxu_dtype), w3t,
                              preferred_element_type=jnp.float32) + b3)

    o_ref[...] = out.astype(o_ref.dtype)              # (PT, B, 128) lane-dense


# --------------------------- wrapper / packing glue --------------------------

def _build_slab_index(obs, hidden, act, obs_pad):
    """Static (R, 128) int32 index array mapping slab positions to flat-noise
    indices of a member PAIR (member A offsets [0,N), member B offsets [N,2N));
    index 2N points at an appended zero element (exact-zero padding)."""
    n = hidden * obs + hidden + hidden * hidden + hidden + act * hidden + act
    r_w2 = obs_pad
    r_w3 = obs_pad + LANE
    r_b = obs_pad + 2 * LANE
    rows = r_b + BIAS_ROWS
    idx = np.full((rows, LANE), 2 * n, dtype=np.int32)
    for m in range(2):
        base = m * n
        lo = m * hidden            # lane offset of member m's hidden units
        co = m * (LANE // 2)       # lane offset of member m's action outputs
        off = base
        # W1 (hidden, obs): W1[o, i] -> slab[i, lo + o]
        idx[0:obs, lo:lo + hidden] = (
            off + np.arange(hidden * obs).reshape(hidden, obs).T)
        off += hidden * obs
        # b1 (hidden,)
        idx[r_b + 0, lo:lo + hidden] = off + np.arange(hidden)
        off += hidden
        # W2 (hidden, hidden): W2[o, i] -> slab[r_w2 + lo + i, lo + o]  (block-diag)
        idx[r_w2 + lo:r_w2 + lo + hidden, lo:lo + hidden] = (
            off + np.arange(hidden * hidden).reshape(hidden, hidden).T)
        off += hidden * hidden
        # b2 (hidden,)
        idx[r_b + 1, lo:lo + hidden] = off + np.arange(hidden)
        off += hidden
        # W3 (act, hidden): W3[o, i] -> slab[r_w3 + lo + i, co + o]
        idx[r_w3 + lo:r_w3 + lo + hidden, co:co + act] = (
            off + np.arange(act * hidden).reshape(act, hidden).T)
        off += act * hidden
        # b3 (act,)
        idx[r_b + 2, co:co + act] = off + np.arange(act)
        off += act
    return jnp.asarray(idx), n, rows


def _pack_slabs(flat_pairs, idx):
    """flat_pairs: (Q, 2N) pair-flattened params/noise -> (Q, R, 128) via one gather."""
    zero = jnp.zeros((flat_pairs.shape[0], 1), flat_pairs.dtype)
    return jnp.concatenate([flat_pairs, zero], axis=1)[:, idx]


def actor_forward_population(x, params, noise_batch, *,
                             mxu_dtype=jnp.bfloat16,
                             noise_slab_dtype=jnp.float32,
                             pt_pairs=8):
    """Evaluate Actor.forward for P noise perturbations in one Pallas call.

    params = (W1, b1, W2, b2, W3, b3) with W: (out, in), b: (out,).
    noise_batch: (P, num_params) flat noise, state_dict order per member.
    Returns (P, B, act_dim) float32.
    noise_slab_dtype=jnp.bfloat16 halves the dominant HBM stream (perturbation
    precision reduced; keep float32 for exact-parity tests).
    """
    w1, b1, w2, b2, w3, b3 = params
    hidden, obs = w1.shape
    act = w3.shape[0]
    assert 2 * hidden <= LANE and act <= LANE // 2, \
        "two-member lane packing requires hidden<=64 and act<=64"
    bsz = x.shape[0]
    p = noise_batch.shape[0]
    obs_pad = _round_up(obs, 8)

    idx, n_params, rows = _build_slab_index(obs, hidden, act, obs_pad)
    assert noise_batch.shape[1] == n_params

    # ---- layout plumbing (plain JAX, outside the kernel; math stays inside) ----
    params_flat = jnp.concatenate([
        w1.reshape(-1), b1, w2.reshape(-1), b2, w3.reshape(-1), b3
    ]).astype(jnp.float32)
    params_slab = _pack_slabs(
        jnp.concatenate([params_flat, params_flat])[None], idx)[0]   # (R, 128)

    # pair members up; pad P so the grid is a whole number of (even) steps
    n_pairs = pl.cdiv(p, 2)
    grid_len = pl.cdiv(n_pairs, pt_pairs)
    if grid_len > 1 and grid_len % 2 == 1:
        grid_len += 1            # even grid -> clean split over v7x's 2 TensorCores
    n_pairs_pad = grid_len * pt_pairs
    p_pad = 2 * n_pairs_pad
    noise_padded = jnp.zeros((p_pad, n_params), jnp.float32).at[:p].set(
        noise_batch.astype(jnp.float32))
    noise_slabs = _pack_slabs(
        noise_padded.reshape(n_pairs_pad, 2 * n_params), idx
    ).astype(noise_slab_dtype)                                       # (pairs, R, 128)

    x_pad = jnp.zeros((bsz, obs_pad), jnp.float32).at[:, :obs].set(
        x.astype(jnp.float32))

    kernel = functools.partial(actor_kernel, obs_pad=obs_pad, mxu_dtype=mxu_dtype)

    itemsize = jnp.dtype(noise_slab_dtype).itemsize
    cost = pl.CostEstimate(
        flops=int(2 * p_pad * bsz * (obs * hidden + hidden * hidden + hidden * act)),
        transcendentals=int(3 * n_pairs_pad * bsz * LANE),
        bytes_accessed=int(x_pad.size * 4 + params_slab.size * 4
                           + noise_slabs.size * itemsize
                           + n_pairs_pad * bsz * LANE * 4),
    )

    out = pl.pallas_call(
        kernel,
        out_shape=jax.ShapeDtypeStruct((n_pairs_pad, bsz, LANE), jnp.float32),
        grid=(grid_len,),
        in_specs=[
            pl.BlockSpec((bsz, obs_pad), lambda g: (0, 0)),            # x: resident
            pl.BlockSpec((rows, LANE), lambda g: (0, 0)),              # params: resident
            pl.BlockSpec((pt_pairs, rows, LANE), lambda g: (g, 0, 0)),  # noise tile
        ],
        out_specs=pl.BlockSpec((pt_pairs, bsz, LANE), lambda g: (g, 0, 0)),
        compiler_params=pltpu.CompilerParams(
            dimension_semantics=("parallel",),
            vmem_limit_bytes=32 * 1024 * 1024),
        cost_estimate=cost,
    )(x_pad, params_slab, noise_slabs)

    # unpack the two lane-packed members of each pair, drop padded members
    out_a = out[:, :, 0:act]                              # member 2q
    out_b = out[:, :, LANE // 2:LANE // 2 + act]          # member 2q+1
    return jnp.stack([out_a, out_b], axis=1).reshape(p_pad, bsz, act)[:p]


def actor_forward(x, params, noise_flat, *, mxu_dtype=jnp.bfloat16,
                  noise_slab_dtype=jnp.float32):
    """Single-noise forward, matching Actor.forward(x, noise)."""
    return actor_forward_population(x, params, noise_flat[None, :],
                                    mxu_dtype=mxu_dtype,
                                    noise_slab_dtype=noise_slab_dtype,
                                    pt_pairs=1)[0]


# ------------------------------- demo / check --------------------------------

def xavier_uniform(key, out_f, in_f, gain):
    bound = gain * np.sqrt(6.0 / (in_f + out_f))
    return jax.random.uniform(key, (out_f, in_f), jnp.float32,
                              minval=-bound, maxval=bound)


def reference_forward(x, params, noise_flat, *, cast_dtype=None,
                      noise_round_dtype=None):
    """Pure-JAX reference of Actor.forward (optionally bf16 matmul operands /
    bf16-rounded noise to mirror the bf16-slab fast path)."""
    nf = noise_flat
    if noise_round_dtype is not None:
        nf = nf.astype(noise_round_dtype).astype(jnp.float32)
    off = 0
    pp = []
    for prm in params:
        cnt = int(np.prod(prm.shape))
        pp.append(prm + nf[off:off + cnt].reshape(prm.shape))
        off += cnt
    w1, b1, w2, b2, w3, b3 = pp

    def mm(a, w):
        if cast_dtype is not None:
            a = a.astype(cast_dtype)
            w = w.astype(cast_dtype)
        return jnp.dot(a, w.T, preferred_element_type=jnp.float32)

    h = jnp.tanh(mm(x, w1) + b1)
    h = jnp.tanh(mm(h, w2) + b2)
    return jnp.tanh(mm(h, w3) + b3)


if __name__ == "__main__":
    # small shapes consistent with the module: obs_dim=32, hidden=64, act_dim=8
    B, OBS, H, ACT = 8, 32, 64, 8
    P = 6                                  # noise population evaluated per call
    gain = 5.0 / 3.0

    key = jax.random.PRNGKey(0)
    k1, k2, k3, kx, kn = jax.random.split(key, 5)

    # deterministic init: xavier_uniform(gain=5/3) weights, zero biases
    w1 = xavier_uniform(k1, H, OBS, gain)
    b1 = jnp.zeros((H,), jnp.float32)
    w2 = xavier_uniform(k2, H, H, gain)
    b2 = jnp.zeros((H,), jnp.float32)
    w3 = xavier_uniform(k3, ACT, H, gain)
    b3 = jnp.zeros((ACT,), jnp.float32)
    params = (w1, b1, w2, b2, w3, b3)

    num_params = sum(int(np.prod(p.shape)) for p in params)
    x = jax.random.normal(kx, (B, OBS), jnp.float32)
    noise_batch = 0.05 * jax.random.normal(kn, (P, num_params), jnp.float32)

    # --- f32 MXU + f32 slab path (exact parity check vs f32 reference) -------
    out_f32 = actor_forward_population(x, params, noise_batch,
                                       mxu_dtype=jnp.float32,
                                       noise_slab_dtype=jnp.float32,
                                       pt_pairs=2)
    out_f32 = jax.block_until_ready(out_f32)
    assert out_f32.shape == (P, B, ACT)
    for pi in range(P):
        exp = reference_forward(x, params, noise_batch[pi])
        np.testing.assert_allclose(np.asarray(out_f32[pi]), np.asarray(exp),
                                   rtol=1e-5, atol=1e-5)

    # --- default fast path: bf16 MXU operands, f32 noise slab ----------------
    out_bf16 = actor_forward_population(x, params, noise_batch, pt_pairs=2)
    out_bf16 = jax.block_until_ready(out_bf16)
    assert out_bf16.shape == (P, B, ACT)
    for pi in range(P):
        exp = reference_forward(x, params, noise_batch[pi],
                                cast_dtype=jnp.bfloat16)
        np.testing.assert_allclose(np.asarray(out_bf16[pi]), np.asarray(exp),
                                   rtol=2e-2, atol=2e-2)

    # --- bf16 noise-slab fast path (halves the dominant HBM stream) ----------
    out_bf16s = actor_forward_population(x, params, noise_batch,
                                         noise_slab_dtype=jnp.bfloat16,
                                         pt_pairs=2)
    out_bf16s = jax.block_until_ready(out_bf16s)
    for pi in range(P):
        exp = reference_forward(x, params, noise_batch[pi],
                                cast_dtype=jnp.bfloat16,
                                noise_round_dtype=jnp.bfloat16)
        np.testing.assert_allclose(np.asarray(out_bf16s[pi]), np.asarray(exp),
                                   rtol=2e-2, atol=2e-2)

    # --- single-noise API (original forward semantics) -----------------------
    single = jax.block_until_ready(
        actor_forward(x, params, noise_batch[0], mxu_dtype=jnp.float32))
    np.testing.assert_allclose(np.asarray(single),
                               np.asarray(out_f32[0]), rtol=1e-6, atol=1e-6)

    print("KERNEL_OK")
</pallas_src>

<mosaic_0001>
module attributes {stable_mosaic.version = 11 : i64} {
  func.func @actor_kernel(%arg0: i32, %arg1: memref<8x32xf32, #tpu.memory_space<vmem>>, %arg2: memref<296x128xf32, #tpu.memory_space<vmem>>, %arg3: memref<2x296x128xf32, #tpu.memory_space<vmem>>, %arg4: memref<2x8x128xf32, #tpu.memory_space<vmem>>) attributes {dimension_semantics = [#tpu.dimension_semantics<parallel>], iteration_bounds = array<i64: 2>, scalar_prefetch = 0 : i64, scratch_operands = 0 : i64, tpu.core_type = #tpu.core_type<tc>, window_params = [{pipeline_mode = #tpu.pipeline_mode<synchronous>, transform_indices = @transform_0, window_bounds = array<i64: 8, 32>}, {pipeline_mode = #tpu.pipeline_mode<synchronous>, transform_indices = @transform_1, window_bounds = array<i64: 296, 128>}, {transform_indices = @transform_2, window_bounds = array<i64: 2, 296, 128>}, {transform_indices = @transform_3, window_bounds = array<i64: 2, 8, 128>}]} {
    %c0 = arith.constant 0 : index
    %c0_0 = arith.constant 0 : index
    %0 = vector.load %arg1[%c0, %c0_0] : memref<8x32xf32, #tpu.memory_space<vmem>>, vector<8x32xf32>
    %c0_1 = arith.constant 0 : index
    %c0_2 = arith.constant 0 : index
    %1 = vector.load %arg2[%c0_1, %c0_2] : memref<296x128xf32, #tpu.memory_space<vmem>>, vector<296x128xf32>
    %c0_3 = arith.constant 0 : index
    %c0_4 = arith.constant 0 : index
    %c0_5 = arith.constant 0 : index
    %2 = vector.load %arg3[%c0_3, %c0_4, %c0_5] : memref<2x296x128xf32, #tpu.memory_space<vmem>>, vector<2x296x128xf32>
    %3 = vector.shape_cast %1 : vector<296x128xf32> to vector<1x296x128xf32>
    %4 = vector.broadcast %3 : vector<1x296x128xf32> to vector<2x296x128xf32>
    %5 = arith.addf %4, %2 : vector<2x296x128xf32>
    %6 = vector.extract_strided_slice %5 {offsets = [0, 0, 0], sizes = [2, 32, 128], strides = [1, 1, 1]} : vector<2x296x128xf32> to vector<2x32x128xf32>
    %7 = vector.extract_strided_slice %5 {offsets = [0, 32, 0], sizes = [2, 128, 128], strides = [1, 1, 1]} : vector<2x296x128xf32> to vector<2x128x128xf32>
    %8 = vector.extract_strided_slice %5 {offsets = [0, 160, 0], sizes = [2, 128, 128], strides = [1, 1, 1]} : vector<2x296x128xf32> to vector<2x128x128xf32>
    %9 = vector.extract_strided_slice %5 {offsets = [0, 288, 0], sizes = [2, 1, 128], strides = [1, 1, 1]} : vector<2x296x128xf32> to vector<2x1x128xf32>
    %10 = vector.extract_strided_slice %5 {offsets = [0, 289, 0], sizes = [2, 1, 128], strides = [1, 1, 1]} : vector<2x296x128xf32> to vector<2x1x128xf32>
    %11 = vector.extract_strided_slice %5 {offsets = [0, 290, 0], sizes = [2, 1, 128], strides = [1, 1, 1]} : vector<2x296x128xf32> to vector<2x1x128xf32>
    %12 = vector.shape_cast %0 : vector<8x32xf32> to vector<1x8x32xf32>
    %13 = vector.shape_cast %12 : vector<1x8x32xf32> to vector<1x8x32xf32>
    %14 = vector.broadcast %13 : vector<1x8x32xf32> to vector<2x8x32xf32>
    "tpu.trace_start"() <{level = 10 : i32, message = "pbo,pok->pbk"}> : () -> ()
    %cst = arith.constant dense<0.000000e+00> : vector<2x8x128xf32>
    %15 = tpu.matmul %14, %6, %cst {dimension_numbers = #tpu.dot_dimension_numbers<[2], [1], [1], [2], [0, 0, 0, 1, 1, 2], [0], [0]>} : vector<2x8x32xf32>, vector<2x32x128xf32>, vector<2x8x128xf32> -> vector<2x8x128xf32>
    "tpu.trace_stop"() : () -> ()
    %16 = vector.broadcast %9 : vector<2x1x128xf32> to vector<2x8x128xf32>
    %17 = arith.addf %15, %16 : vector<2x8x128xf32>
    %18 = math.tanh %17 : vector<2x8x128xf32>
    "tpu.trace_start"() <{level = 10 : i32, message = "pbk,pkj->pbj"}> : () -> ()
    %cst_6 = arith.constant dense<0.000000e+00> : vector<2x8x128xf32>
    %19 = tpu.matmul %18, %7, %cst_6 {dimension_numbers = #tpu.dot_dimension_numbers<[2], [1], [1], [2], [0, 0, 0, 1, 1, 2], [0], [0]>} : vector<2x8x128xf32>, vector<2x128x128xf32>, vector<2x8x128xf32> -> vector<2x8x128xf32>
    "tpu.trace_stop"() : () -> ()
    %20 = vector.broadcast %10 : vector<2x1x128xf32> to vector<2x8x128xf32>
    %21 = arith.addf %19, %20 : vector<2x8x128xf32>
    %22 = math.tanh %21 : vector<2x8x128xf32>
    "tpu.trace_start"() <{level = 10 : i32, message = "pbk,pkj->pbj"}> : () -> ()
    %cst_7 = arith.constant dense<0.000000e+00> : vector<2x8x128xf32>
    %23 = tpu.matmul %22, %8, %cst_7 {dimension_numbers = #tpu.dot_dimension_numbers<[2], [1], [1], [2], [0, 0, 0, 1, 1, 2], [0], [0]>} : vector<2x8x128xf32>, vector<2x128x128xf32>, vector<2x8x128xf32> -> vector<2x8x128xf32>
    "tpu.trace_stop"() : () -> ()
    %24 = vector.broadcast %11 : vector<2x1x128xf32> to vector<2x8x128xf32>
    %25 = arith.addf %23, %24 : vector<2x8x128xf32>
    %26 = math.tanh %25 : vector<2x8x128xf32>
    %c0_8 = arith.constant 0 : index
    %c0_9 = arith.constant 0 : index
    %c0_10 = arith.constant 0 : index
    %27 = vector.load %arg4[%c0_8, %c0_9, %c0_10] : memref<2x8x128xf32, #tpu.memory_space<vmem>>, vector<2x8x128xf32>
    tpu.vector_store %arg4[%c0_8, %c0_9, %c0_10], %26 {strides = array<i32>} : memref<2x8x128xf32, #tpu.memory_space<vmem>>, vector<2x8x128xf32>,
    return
  }
  func.func @transform_0(%arg0: i32) -> (i32, i32) {
    %c0_i32 = arith.constant 0 : i32
    %c0_i32_0 = arith.constant 0 : i32
    %c0_i32_1 = arith.constant 0 : i32
    return %c0_i32, %c0_i32_0 : i32, i32
  }
  func.func @transform_1(%arg0: i32) -> (i32, i32) {
    %c0_i32 = arith.constant 0 : i32
    %c0_i32_0 = arith.constant 0 : i32
    %c0_i32_1 = arith.constant 0 : i32
    return %c0_i32, %c0_i32_0 : i32, i32
  }
  func.func @transform_2(%arg0: i32) -> (i32, i32, i32) {
    %c0_i32 = arith.constant 0 : i32
    %c0_i32_0 = arith.constant 0 : i32
    %c0_i32_1 = arith.constant 0 : i32
    return %arg0, %c0_i32, %c0_i32_0 : i32, i32, i32
  }
  func.func @transform_3(%arg0: i32) -> (i32, i32, i32) {
    %c0_i32 = arith.constant 0 : i32
    %c0_i32_0 = arith.constant 0 : i32
    %c0_i32_1 = arith.constant 0 : i32
    return %arg0, %c0_i32, %c0_i32_0 : i32, i32, i32
  }
}

</mosaic_0001>

<llo_original>
// kernel: tpu_custom_call.1
$region0: #{tpu_custom_call.1}
  #allocation0 [shape = 'u32[]', space=smem, size = 0x4, offset = 0x4, fixed_abs, tag = 'smem constant byte address 0x4 - core index']
  #allocation1 [shape = 'u32[72,128]{1,0:T(1,128)}', space=vmem, size = 0x9000, scoped, tag = 'internal scratch']
  %s0 = inlined_call_operand.hbm [shape: f32[8,32], index: 0, kind: input, shape index: {}]
  %s1 = inlined_call_operand.hbm [shape: f32[296,128], index: 1, kind: input, shape index: {}]
  %s2 = inlined_call_operand.hbm [shape: f32[4,296,128], index: 2, kind: input, shape index: {}]
  %s3 = inlined_call_operand.hbm [shape: f32[4,8,128], index: 3, kind: output, shape index: {}]
  %s4 = sld [smem:[#allocation0]]
  $region57: #{tpu_custom_call.1} parent=0
    _
  %s6 = ssub.s32 1, %s4
  %s7 = scalar_select 0, %s6, %s4
  $region1: #{tpu_custom_call.1} parent=0
    #allocation2 [shape = 'u8[4096]{0}', space=vmem, size = 0x1000, scoped, tag = 'input window, operand 0, single buffered']
    #allocation3 [shape = 's32[2]{0}', space=sflag, size = 0x8, scoped, tag = 'scoped memory for tpu_custom_call.1']
    #allocation4 [shape = 's32[2]{0}', space=sflag, size = 0x8, scoped, tag = 'scoped memory for tpu_custom_call.1']
    #allocation5 [shape = 'u8[151552]{0}', space=vmem, size = 0x25000, scoped, tag = 'input window, operand 1, single buffered']
    #allocation6 [shape = 's32[1]{0}', space=sflag, size = 0x4, scoped, tag = 'scoped memory for tpu_custom_call.1']
    #allocation7 [shape = 'u8[606208]{0}', space=vmem, size = 0x94000, scoped, tag = 'input window, operand 2']
    #allocation8 [shape = 'u8[16384]{0}', space=vmem, size = 0x4000, scoped, tag = 'output window, operand 0']
    %8 = vsyncpa [#allocation3], 0
    %9 = vsyncpa [#allocation6], 0
    %10 = vsyncpa [#allocation4], 0
    %s11 = scalar_lea.sflag [#allocation4], 1
    %12 = vsyncpa %s11, 0
    loop: start=0, step=1, limit=4
    $region2: #{tpu_custom_call.1} parent=1 // loop_pre_header
      _
    $region3: #{tpu_custom_call.1} parent=1 // loop_header
      %s14 = sphi 0, %s18
      %p15 = scmp.ge.s32.totalorder %s14, 4
      %s22 = sphi 0, %s22
      %s24 = sphi 0, %s22
      %s25 = sphi 0, %s24
      %s39 = sphi 0, %s25
      %s43 = sphi 0, %s43
      %s45 = sphi 0, %s43
      %s46 = sphi 0, %s45
      %s60 = sphi 0, %s46
      %s66 = sphi 0, %s68
      %s69 = sphi 0, %s66
      %s70 = sphi 0, %s69
      %s86 = sphi 0, %s70
      %s92 = sphi 0, %s94
      %s95 = sphi 0, %s92
      %s96 = sphi 0, %s95
      %s112 = sphi 0, %s96
    $region4: #{tpu_custom_call.1} parent=1 // loop_header_branch
      %17 = sbr.rel (%p15) target = $region8
    $region5: #{tpu_custom_call.1} parent=1 // loop_body
      %s19 = ssub.s32 %s14, 1
      %s20 = ssub.s32 %s14, 2
      %s21 = sadd.s32 %s14, 1
      %s23 = sadd.s32 %s22, 1
      %p26 = scmp.eq.s32.totalorder %s14, 1
      %p27 = scmp.ne.s32.totalorder %s22, %s24
      %p28 = scmp.eq.s32.totalorder %s14, 0
      %p29 = por %p27, %p28
      %p30 = scmp.ne.s32.totalorder %s22, %s24
      %p31 = scmp.eq.s32.totalorder %s19, 1
      %p32 = por %p30, %p31
      %p33 = scmp.ne.s32.totalorder %s24, %s25
      %p34 = scmp.eq.s32.totalorder %s19, 0
      %p35 = por %p33, %p34
      %p36 = scmp.ne.s32.totalorder %s24, %s25
      %p37 = scmp.eq.s32.totalorder %s20, 1
      %p38 = por %p36, %p37
      %p40 = scmp.ne.s32.totalorder %s25, %s39
      %p41 = scmp.eq.s32.totalorder %s20, 0
      %p42 = por %p40, %p41
      %s44 = sadd.s32 %s43, 1
      %p47 = scmp.eq.s32.totalorder %s14, 1
      %p48 = scmp.ne.s32.totalorder %s43, %s45
      %p49 = scmp.eq.s32.totalorder %s14, 0
      %p50 = por %p48, %p49
      %p51 = scmp.ne.s32.totalorder %s43, %s45
      %p52 = scmp.eq.s32.totalorder %s19, 1
      %p53 = por %p51, %p52
      %p54 = scmp.ne.s32.totalorder %s45, %s46
      %p55 = scmp.eq.s32.totalorder %s19, 0
      %p56 = por %p54, %p55
      %p57 = scmp.ne.s32.totalorder %s45, %s46
      %p58 = scmp.eq.s32.totalorder %s20, 1
      %p59 = por %p57, %p58
      %p61 = scmp.ne.s32.totalorder %s46, %s60
      %p62 = scmp.eq.s32.totalorder %s20, 0
      %p63 = por %p61, %p62
      %s64 = ssub.s32 %s14, %s21
      %p65 = scmp.eq.s32.totalorder %s64, 0
      %s67 = sadd.s32 %s66, 1
      %s68 = scalar_select %p65, %s66, %s67
      %p71 = pneg %p65
      %p72 = scmp.eq.s32.totalorder %s14, 1
      %p73 = por %p71, %p72
      %p74 = scmp.ne.s32.totalorder %s66, %s69
      %p75 = scmp.eq.s32.totalorder %s14, 0
      %p76 = por %p74, %p75
      %p77 = scmp.ne.s32.totalorder %s66, %s69
      %p78 = scmp.eq.s32.totalorder %s19, 1
      %p79 = por %p77, %p78
      %p80 = scmp.ne.s32.totalorder %s69, %s70
      %p81 = scmp.eq.s32.totalorder %s19, 0
      %p82 = por %p80, %p81
      %p83 = scmp.ne.s32.totalorder %s69, %s70
      %p84 = scmp.eq.s32.totalorder %s20, 1
      %p85 = por %p83, %p84
      %p87 = scmp.ne.s32.totalorder %s70, %s86
      %p88 = scmp.eq.s32.totalorder %s20, 0
      %p89 = por %p87, %p88
      %s90 = ssub.s32 %s14, %s21
      %p91 = scmp.eq.s32.totalorder %s90, 0
      %s93 = sadd.s32 %s92, 1
      %s94 = scalar_select %p91, %s92, %s93
      %p97 = pneg %p91
      %p98 = scmp.eq.s32.totalorder %s14, 1
      %p99 = por %p97, %p98
      %p100 = scmp.ne.s32.totalorder %s92, %s95
      %p101 = scmp.eq.s32.totalorder %s14, 0
      %p102 = por %p100, %p101
      %p103 = scmp.ne.s32.totalorder %s92, %s95
      %p104 = scmp.eq.s32.totalorder %s19, 1
      %p105 = por %p103, %p104
      %p106 = scmp.ne.s32.totalorder %s95, %s96
      %p107 = scmp.eq.s32.totalorder %s19, 0
      %p108 = por %p106, %p107
      %p109 = scmp.ne.s32.totalorder %s95, %s96
      %p110 = scmp.eq.s32.totalorder %s20, 1
      %p111 = por %p109, %p110
      %p113 = scmp.ne.s32.totalorder %s96, %s112
      %p114 = scmp.eq.s32.totalorder %s20, 0
      %p115 = por %p113, %p114
      %p116 = scmp.le.s32.totalorder 1, %s14
      %p117 = scmp.lt.s32.totalorder %s14, 3
      %p118 = pnand %p116, %p117
      %p119 = pneg %p118
      // Predicated region
      $region9: #{tpu_custom_call.1} parent=5 // pred_check
        _
      $region10: #{tpu_custom_call.1} parent=5 // pred_check_branch
        %121 = sbr.rel (%p118) target = $region12
      $region11: #{tpu_custom_call.1} parent=5 // pred_region
        %s122 = ssub.s32 %s14, 1
        // Predicated region
        $region13: #{tpu_custom_call.1} parent=11 // pred_check
          %p123 = pneg %p35
        $region14: #{tpu_custom_call.1} parent=11 // pred_check_branch
          %125 = sbr.rel (%p123) target = $region16
        $region15: #{tpu_custom_call.1} parent=11 // pred_region
          %127 = vsyncadd [#allocation3], 0
          %s129 = sshll.u32 %s0, 4
          %s130 = int_to_ptr.hbm [resolvable:$true] %s129
          %s131 = sshll.u32 [#allocation2], 4
          %s132 = int_to_ptr.vmem [resolvable:$true] %s131
          %134 = dma.hbm_to_vmem [thread:$0]  %s130, 128, %s132, [#allocation3]
        $region16: #{tpu_custom_call.1} parent=11 // pred_fallthru
          _
        // Predicated region
        $region17: #{tpu_custom_call.1} parent=11 // pred_check
          %p135 = pneg %p56
        $region18: #{tpu_custom_call.1} parent=11 // pred_check_branch
          %137 = sbr.rel (%p135) target = $region20
        $region19: #{tpu_custom_call.1} parent=11 // pred_region
          %139 = vsyncadd [#allocation6], 0
          %s140 = sshll.u32 %s1, 4
          %s141 = int_to_ptr.hbm [resolvable:$true] %s140
          %s142 = sshll.u32 [#allocation5], 4
          %s143 = int_to_ptr.vmem [resolvable:$true] %s142
          %148 = dma.hbm_to_vmem [thread:$0]  %s141, 4736, %s143, [#allocation6], 128, 128, 8
        $region20: #{tpu_custom_call.1} parent=11 // pred_fallthru
          _
      $region12: #{tpu_custom_call.1} parent=5 // pred_fallthru
        _
      %p149 = scmp.lt.s32.totalorder %s14, 2
      // Predicated region
      $region21: #{tpu_custom_call.1} parent=5 // pred_check
        %p150 = pneg %p149
      $region22: #{tpu_custom_call.1} parent=5 // pred_check_branch
        %152 = sbr.rel (%p150) target = $region24
      $region23: #{tpu_custom_call.1} parent=5 // pred_region
        // Predicated region
        $region25: #{tpu_custom_call.1} parent=23 // pred_check
          %p153 = pneg %p76
        $region26: #{tpu_custom_call.1} parent=23 // pred_check_branch
          %155 = sbr.rel (%p153) target = $region28
        $region27: #{tpu_custom_call.1} parent=23 // pred_region
          %s156 = sand.u32 %s14, 1
          %s157 = scalar_lea.sflag [#allocation3], %s156
          %s158 = sand.u32 %s66, 1
          %s159 = smul.addr %s158, 592
          %s160 = scalar_lea.vmem [#allocation7], %s159
          %s161 = smul.u32 2, %s14
          %163 = vsyncadd %s157, 0
          %s164 = smul.addr %s161, 37
          %s165 = smul.addr %s164, 8
          %s166 = scalar_lea.hbm %s2, %s165
          %s167 = sshll.u32 %s166, 4
          %s168 = int_to_ptr.hbm [resolvable:$true] %s167
          %s169 = sshll.u32 %s160, 4
          %s170 = int_to_ptr.vmem [resolvable:$true] %s169
          %175 = dma.hbm_to_vmem [thread:$0]  %s168, 9472, %s170, %s157, 128, 128, 8
        $region28: #{tpu_custom_call.1} parent=23 // pred_fallthru
          _
      $region24: #{tpu_custom_call.1} parent=5 // pred_fallthru
        _
      %p176 = scmp.le.s32.totalorder 1, %s14
      %p177 = scmp.lt.s32.totalorder %s14, 3
      %p178 = pnand %p176, %p177
      %p179 = pneg %p178
      // Predicated region
      $region29: #{tpu_custom_call.1} parent=5 // pred_check
        _
      $region30: #{tpu_custom_call.1} parent=5 // pred_check_branch
        %181 = sbr.rel (%p178) target = $region32
      $region31: #{tpu_custom_call.1} parent=5 // pred_region
        %s182 = ssub.s32 %s14, 1
        // Predicated region
        $region33: #{tpu_custom_call.1} parent=31 // pred_check
          %p183 = pneg %p35
        $region34: #{tpu_custom_call.1} parent=31 // pred_check_branch
          %185 = sbr.rel (%p183) target = $region36
        $region35: #{tpu_custom_call.1} parent=31 // pred_region
          %187 = dma.done [#allocation3], 128
        $region36: #{tpu_custom_call.1} parent=31 // pred_fallthru
          _
        // Predicated region
        $region37: #{tpu_custom_call.1} parent=31 // pred_check
          %p188 = pneg %p56
        $region38: #{tpu_custom_call.1} parent=31 // pred_check_branch
          %190 = sbr.rel (%p188) target = $region40
        $region39: #{tpu_custom_call.1} parent=31 // pred_region
          %192 = dma.done [#allocation6], 4736
        $region40: #{tpu_custom_call.1} parent=31 // pred_fallthru
          _
        %s193 = sand.u32 %s19, 1
        %s194 = scalar_lea.sflag [#allocation3], %s193
        %s195 = sand.u32 %s69, 1
        %s196 = smul.addr %s195, 592
        %s197 = scalar_lea.vmem [#allocation7], %s196
        // Predicated region
        $region41: #{tpu_custom_call.1} parent=31 // pred_check
          %p198 = pneg %p82
        $region42: #{tpu_custom_call.1} parent=31 // pred_check_branch
          %200 = sbr.rel (%p198) target = $region44
        $region43: #{tpu_custom_call.1} parent=31 // pred_region
          %202 = dma.done %s194, 9472
        $region44: #{tpu_custom_call.1} parent=31 // pred_fallthru
          _
        %p203 = pneg %p35
        %p204 = pneg %p32
        %p205 = pneg %p56
        %p206 = pneg %p53
        %s207 = sand.u32 %s19, 1
        %s208 = scalar_lea.sflag [#allocation3], %s207
        %s209 = sand.u32 %s69, 1
        %s210 = smul.addr %s209, 592
        %s211 = scalar_lea.vmem [#allocation7], %s210
        %p212 = pneg %p82
        %p213 = pneg %p79
        %p214 = pneg %p108
        %p215 = pneg %p105
        %s216 = sand.u32 %s95, 1
        %s217 = scalar_lea.sflag [#allocation4], %s216
        %s218 = sand.u32 %s95, 1
        %s219 = smul.addr %s218, 16
        %s220 = scalar_lea.vmem [#allocation8], %s219
        %s221 = smul.u32 2, %s19
        %s222 = smul.u32 2, %s19
        %v223 = vld [vmem:[#allocation2] sm:$0xff]
        %v224 = vld [vmem:[#allocation5] sm:$0xff]
        %v225 = vld [vmem:[#allocation5 + $0x8] sm:$0xff]
        %v226 = vld [vmem:[#allocation5 + $0x10] sm:$0xff]
        %v227 = vld [vmem:[#allocation5 + $0x18] sm:$0xff]
        %v228 = vld [vmem:[#allocation5 + $0x20] sm:$0xff]
        %v229 = vld [vmem:[#allocation5 + $0x28] sm:$0xff]
        %v230 = vld [vmem:[#allocation5 + $0x30] sm:$0xff]
        %v231 = vld [vmem:[#allocation5 + $0x38] sm:$0xff]
        %v232 = vld [vmem:[#allocation5 + $0x40] sm:$0xff]
        %v233 = vld [vmem:[#allocation5 + $0x48] sm:$0xff]
        %v234 = vld [vmem:[#allocation5 + $0x50] sm:$0xff]
        %v235 = vld [vmem:[#allocation5 + $0x58] sm:$0xff]
        %v236 = vld [vmem:[#allocation5 + $0x60] sm:$0xff]
        %v237 = vld [vmem:[#allocation5 + $0x68] sm:$0xff]
        %v238 = vld [vmem:[#allocation5 + $0x70] sm:$0xff]
        %v239 = vld [vmem:[#allocation5 + $0x78] sm:$0xff]
        %v240 = vld [vmem:[#allocation5 + $0x80] sm:$0xff]
        %v241 = vld [vmem:[#allocation5 + $0x88] sm:$0xff]
        %v242 = vld [vmem:[#allocation5 + $0x90] sm:$0xff]
        %v243 = vld [vmem:[#allocation5 + $0x98] sm:$0xff]
        %v244 = vld [vmem:[#allocation5 + $0xa0] sm:$0xff]
        %v245 = vld [vmem:[#allocation5 + $0xa8] sm:$0xff]
        %v246 = vld [vmem:[#allocation5 + $0xb0] sm:$0xff]
        %v247 = vld [vmem:[#allocation5 + $0xb8] sm:$0xff]
        %v248 = vld [vmem:[#allocation5 + $0xc0] sm:$0xff]
        %v249 = vld [vmem:[#allocation5 + $0xc8] sm:$0xff]
        %v250 = vld [vmem:[#allocation5 + $0xd0] sm:$0xff]
        %v251 = vld [vmem:[#allocation5 + $0xd8] sm:$0xff]
        %v252 = vld [vmem:[#allocation5 + $0xe0] sm:$0xff]
        %v253 = vld [vmem:[#allocation5 + $0xe8] sm:$0xff]
        %v254 = vld [vmem:[#allocation5 + $0xf0] sm:$0xff]
        %v255 = vld [vmem:[#allocation5 + $0xf8] sm:$0xff]
        %v256 = vld [vmem:[#allocation5 + $0x100] sm:$0xff]
        %v257 = vld [vmem:[#allocation5 + $0x108] sm:$0xff]
        %v258 = vld [vmem:[#allocation5 + $0x110] sm:$0xff]
        %v259 = vld [vmem:[#allocation5 + $0x118] sm:$0xff]
        %v260 = vld [vmem:[#allocation5 + $0x120] sm:$0xff]
        %v261 = vld [vmem:[%s197] sm:$0xff]
        %v262 = vld [vmem:[%s197 + $0x8] sm:$0xff]
        %v263 = vld [vmem:[%s197 + $0x10] sm:$0xff]
        %v264 = vld [vmem:[%s197 + $0x18] sm:$0xff]
        %v265 = vld [vmem:[%s197 + $0x20] sm:$0xff]
        %v266 = vld [vmem:[%s197 + $0x28] sm:$0xff]
        %v267 = vld [vmem:[%s197 + $0x30] sm:$0xff]
        %v268 = vld [vmem:[%s197 + $0x38] sm:$0xff]
        %v269 = vld [vmem:[%s197 + $0x40] sm:$0xff]
        %v270 = vld [vmem:[%s197 + $0x48] sm:$0xff]
        %v271 = vld [vmem:[%s197 + $0x50] sm:$0xff]
        %v272 = vld [vmem:[%s197 + $0x58] sm:$0xff]
        %v273 = vld [vmem:[%s197 + $0x60] sm:$0xff]
        %v274 = vld [vmem:[%s197 + $0x68] sm:$0xff]
        %v275 = vld [vmem:[%s197 + $0x70] sm:$0xff]
        %v276 = vld [vmem:[%s197 + $0x78] sm:$0xff]
        %v277 = vld [vmem:[%s197 + $0x80] sm:$0xff]
        %v278 = vld [vmem:[%s197 + $0x88] sm:$0xff]
        %v279 = vld [vmem:[%s197 + $0x90] sm:$0xff]
        %v280 = vld [vmem:[%s197 + $0x98] sm:$0xff]
        %v281 = vld [vmem:[%s197 + $0xa0] sm:$0xff]
        %v282 = vld [vmem:[%s197 + $0xa8] sm:$0xff]
        %v283 = vld [vmem:[%s197 + $0xb0] sm:$0xff]
        %v284 = vld [vmem:[%s197 + $0xb8] sm:$0xff]
        %v285 = vld [vmem:[%s197 + $0xc0] sm:$0xff]
        %v286 = vld [vmem:[%s197 + $0xc8] sm:$0xff]
        %v287 = vld [vmem:[%s197 + $0xd0] sm:$0xff]
        %v288 = vld [vmem:[%s197 + $0xd8] sm:$0xff]
        %v289 = vld [vmem:[%s197 + $0xe0] sm:$0xff]
        %v290 = vld [vmem:[%s197 + $0xe8] sm:$0xff]
        %v291 = vld [vmem:[%s197 + $0xf0] sm:$0xff]
        %v292 = vld [vmem:[%s197 + $0xf8] sm:$0xff]
        %v293 = vld [vmem:[%s197 + $0x100] sm:$0xff]
        %v294 = vld [vmem:[%s197 + $0x108] sm:$0xff]
        %v295 = vld [vmem:[%s197 + $0x110] sm:$0xff]
        %v296 = vld [vmem:[%s197 + $0x118] sm:$0xff]
        %v297 = vld [vmem:[%s197 + $0x120] sm:$0xff]
        %v298 = vld [vmem:[%s197 + $0x128] sm:$0xff]
        %v299 = vld [vmem:[%s197 + $0x130] sm:$0xff]
        %v300 = vld [vmem:[%s197 + $0x138] sm:$0xff]
        %v301 = vld [vmem:[%s197 + $0x140] sm:$0xff]
        %v302 = vld [vmem:[%s197 + $0x148] sm:$0xff]
        %v303 = vld [vmem:[%s197 + $0x150] sm:$0xff]
        %v304 = vld [vmem:[%s197 + $0x158] sm:$0xff]
        %v305 = vld [vmem:[%s197 + $0x160] sm:$0xff]
        %v306 = vld [vmem:[%s197 + $0x168] sm:$0xff]
        %v307 = vld [vmem:[%s197 + $0x170] sm:$0xff]
        %v308 = vld [vmem:[%s197 + $0x178] sm:$0xff]
        %v309 = vld [vmem:[%s197 + $0x180] sm:$0xff]
        %v310 = vld [vmem:[%s197 + $0x188] sm:$0xff]
        %v311 = vld [vmem:[%s197 + $0x190] sm:$0xff]
        %v312 = vld [vmem:[%s197 + $0x198] sm:$0xff]
        %v313 = vld [vmem:[%s197 + $0x1a0] sm:$0xff]
        %v314 = vld [vmem:[%s197 + $0x1a8] sm:$0xff]
        %v315 = vld [vmem:[%s197 + $0x1b0] sm:$0xff]
        %v316 = vld [vmem:[%s197 + $0x1b8] sm:$0xff]
        %v317 = vld [vmem:[%s197 + $0x1c0] sm:$0xff]
        %v318 = vld [vmem:[%s197 + $0x1c8] sm:$0xff]
        %v319 = vld [vmem:[%s197 + $0x1d0] sm:$0xff]
        %v320 = vld [vmem:[%s197 + $0x1d8] sm:$0xff]
        %v321 = vld [vmem:[%s197 + $0x1e0] sm:$0xff]
        %v322 = vld [vmem:[%s197 + $0x1e8] sm:$0xff]
        %v323 = vld [vmem:[%s197 + $0x1f0] sm:$0xff]
        %v324 = vld [vmem:[%s197 + $0x1f8] sm:$0xff]
        %v325 = vld [vmem:[%s197 + $0x200] sm:$0xff]
        %v326 = vld [vmem:[%s197 + $0x208] sm:$0xff]
        %v327 = vld [vmem:[%s197 + $0x210] sm:$0xff]
        %v328 = vld [vmem:[%s197 + $0x218] sm:$0xff]
        %v329 = vld [vmem:[%s197 + $0x220] sm:$0xff]
        %v330 = vld [vmem:[%s197 + $0x228] sm:$0xff]
        %v331 = vld [vmem:[%s197 + $0x230] sm:$0xff]
        %v332 = vld [vmem:[%s197 + $0x238] sm:$0xff]
        %v333 = vld [vmem:[%s197 + $0x240] sm:$0xff]
        %v334 = vld [vmem:[%s197 + $0x248] sm:$0xff]
        %v335 = vadd.f32 %v224, %v261
        %v336 = vadd.f32 %v225, %v262
        %v337 = vadd.f32 %v226, %v263
        %v338 = vadd.f32 %v227, %v264
        %v339 = vadd.f32 %v228, %v265
        %v340 = vadd.f32 %v229, %v266
        %v341 = vadd.f32 %v230, %v267
        %v342 = vadd.f32 %v231, %v268
        %v343 = vadd.f32 %v232, %v269
        %v344 = vadd.f32 %v233, %v270
        %v345 = vadd.f32 %v234, %v271
        %v346 = vadd.f32 %v235, %v272
        %v347 = vadd.f32 %v236, %v273
        %v348 = vadd.f32 %v237, %v274
        %v349 = vadd.f32 %v238, %v275
        %v350 = vadd.f32 %v239, %v276
        %v351 = vadd.f32 %v240, %v277
        %v352 = vadd.f32 %v241, %v278
        %v353 = vadd.f32 %v242, %v279
        %v354 = vadd.f32 %v243, %v280
        %v355 = vadd.f32 %v244, %v281
        %v356 = vadd.f32 %v245, %v282
        %v357 = vadd.f32 %v246, %v283
        %v358 = vadd.f32 %v247, %v284
        %v359 = vadd.f32 %v248, %v285
        %v360 = vadd.f32 %v249, %v286
        %v361 = vadd.f32 %v250, %v287
        %v362 = vadd.f32 %v251, %v288
        %v363 = vadd.f32 %v252, %v289
        %v364 = vadd.f32 %v253, %v290
        %v365 = vadd.f32 %v254, %v291
        %v366 = vadd.f32 %v255, %v292
        %v367 = vadd.f32 %v256, %v293
        %v368 = vadd.f32 %v257, %v294
        %v369 = vadd.f32 %v258, %v295
        %v370 = vadd.f32 %v259, %v296
        %v371 = vadd.f32 %v260, %v297
        %v372 = vadd.f32 %v224, %v298
        %v373 = vadd.f32 %v225, %v299
        %v374 = vadd.f32 %v226, %v300
        %v375 = vadd.f32 %v227, %v301
        %v376 = vadd.f32 %v228, %v302
        %v377 = vadd.f32 %v229, %v303
        %v378 = vadd.f32 %v230, %v304
        %v379 = vadd.f32 %v231, %v305
        %v380 = vadd.f32 %v232, %v306
        %v381 = vadd.f32 %v233, %v307
        %v382 = vadd.f32 %v234, %v308
        %v383 = vadd.f32 %v235, %v309
        %v384 = vadd.f32 %v236, %v310
        %v385 = vadd.f32 %v237, %v311
        %v386 = vadd.f32 %v238, %v312
        %v387 = vadd.f32 %v239, %v313
        %v388 = vadd.f32 %v240, %v314
        %v389 = vadd.f32 %v241, %v315
        %v390 = vadd.f32 %v242, %v316
        %v391 = vadd.f32 %v243, %v317
        %v392 = vadd.f32 %v244, %v318
        %v393 = vadd.f32 %v245, %v319
        %v394 = vadd.f32 %v246, %v320
        %v395 = vadd.f32 %v247, %v321
        %v396 = vadd.f32 %v248, %v322
        %v397 = vadd.f32 %v249, %v323
        %v398 = vadd.f32 %v250, %v324
        %v399 = vadd.f32 %v251, %v325
        %v400 = vadd.f32 %v252, %v326
        %v401 = vadd.f32 %v253, %v327
        %v402 = vadd.f32 %v254, %v328
        %v403 = vadd.f32 %v255, %v329
        %v404 = vadd.f32 %v256, %v330
        %v405 = vadd.f32 %v257, %v331
        %v406 = vadd.f32 %v258, %v332
        %v407 = vadd.f32 %v259, %v333
        %v408 = vadd.f32 %v260, %v334
        %v409 = vperm.slane %v371, 0
        %v410 = vperm.slane %v408, 0
        %vm411 = vcmask 261120
        %v413 = vsel %vm411, %v223, 0
        %415 = vmatpush.msra.mxu0 0.0
        %416 = vmatpush.msra.mxu0 0.0
        %417 = vmatpush.msra.mxu0 0.0
        %418 = vmatpush.msra.mxu0 0.0
        %419 = vmatpush.msra.mxu0 0.0
        %420 = vmatpush.msra.mxu0 0.0
        %421 = vmatpush.msra.mxu0 0.0
        %422 = vmatpush.msra.mxu0 0.0
        %423 = vmatpush.msra.mxu0 0.0
        %424 = vmatpush.msra.mxu0 0.0
        %425 = vmatpush.msra.mxu0 0.0
        %426 = vmatpush.msra.mxu0 0.0
        %427 = vmatpush.msra.mxu0 %v338
        %428 = vmatpush.msra.mxu0 %v337
        %429 = vmatpush.msra.mxu0 %v336
        %430 = vmatpush.msra.mxu0 %v335
        %431 = vmatmul.f32.gmra.mxu0 %v413
        %v432 = vpop.f32.mrf.mxu0
        %v433 = vadd.f32 %v409, %v432
        %434 = vdwg.mxu0
        %435 = vmatpush.msra.mxu0 0.0
        %436 = vmatpush.msra.mxu0 0.0
        %437 = vmatpush.msra.mxu0 0.0
        %438 = vmatpush.msra.mxu0 0.0
        %439 = vmatpush.msra.mxu0 0.0
        %440 = vmatpush.msra.mxu0 0.0
        %441 = vmatpush.msra.mxu0 0.0
        %442 = vmatpush.msra.mxu0 0.0
        %443 = vmatpush.msra.mxu0 0.0
        %444 = vmatpush.msra.mxu0 0.0
        %445 = vmatpush.msra.mxu0 0.0
        %446 = vmatpush.msra.mxu0 0.0
        %447 = vmatpush.msra.mxu0 %v375
        %448 = vmatpush.msra.mxu0 %v374
        %449 = vmatpush.msra.mxu0 %v373
        %450 = vmatpush.msra.mxu0 %v372
        %451 = vmatmul.f32.gmra.mxu0 %v413
        %v452 = vpop.f32.mrf.mxu0
        %v453 = vadd.f32 %v410, %v452
        %454 = vdwg.mxu0
        %v455 = vtanh.pop %v433
        %v456 = vtanh.pop %v453
        %v457 = vperm.slane %v371, 1
        %v458 = vperm.slane %v408, 1
        %459 = vmatpush.msra.mxu0 %v354
        %460 = vmatpush.msra.mxu0 %v353
        %461 = vmatpush.msra.mxu0 %v352
        %462 = vmatpush.msra.mxu0 %v351
        %463 = vmatpush.msra.mxu0 %v350
        %464 = vmatpush.msra.mxu0 %v349
        %465 = vmatpush.msra.mxu0 %v348
        %466 = vmatpush.msra.mxu0 %v347
        %467 = vmatpush.msra.mxu0 %v346
        %468 = vmatpush.msra.mxu0 %v345
        %469 = vmatpush.msra.mxu0 %v344
        %470 = vmatpush.msra.mxu0 %v343
        %471 = vmatpush.msra.mxu0 %v342
        %472 = vmatpush.msra.mxu0 %v341
        %473 = vmatpush.msra.mxu0 %v340
        %474 = vmatpush.msra.mxu0 %v339
        %475 = vmatmul.f32.gmra.mxu0 %v455
        %v476 = vpop.f32.mrf.mxu0
        %v477 = vadd.f32 %v457, %v476
        %478 = vdwg.mxu0
        %479 = vmatpush.msra.mxu0 %v391
        %480 = vmatpush.msra.mxu0 %v390
        %481 = vmatpush.msra.mxu0 %v389
        %482 = vmatpush.msra.mxu0 %v388
        %483 = vmatpush.msra.mxu0 %v387
        %484 = vmatpush.msra.mxu0 %v386
        %485 = vmatpush.msra.mxu0 %v385
        %486 = vmatpush.msra.mxu0 %v384
        %487 = vmatpush.msra.mxu0 %v383
        %488 = vmatpush.msra.mxu0 %v382
        %489 = vmatpush.msra.mxu0 %v381
        %490 = vmatpush.msra.mxu0 %v380
        %491 = vmatpush.msra.mxu0 %v379
        %492 = vmatpush.msra.mxu0 %v378
        %493 = vmatpush.msra.mxu0 %v377
        %494 = vmatpush.msra.mxu0 %v376
        %495 = vmatmul.f32.gmra.mxu0 %v456
        %v496 = vpop.f32.mrf.mxu0
        %v497 = vadd.f32 %v458, %v496
        %498 = vdwg.mxu0
        %v499 = vtanh.pop %v477
        %v500 = vtanh.pop %v497
        %v501 = vperm.slane %v371, 2
        %v502 = vperm.slane %v408, 2
        %503 = vmatpush.msra.mxu0 %v370
        %504 = vmatpush.msra.mxu0 %v369
        %505 = vmatpush.msra.mxu0 %v368
        %506 = vmatpush.msra.mxu0 %v367
        %507 = vmatpush.msra.mxu0 %v366
        %508 = vmatpush.msra.mxu0 %v365
        %509 = vmatpush.msra.mxu0 %v364
        %510 = vmatpush.msra.mxu0 %v363
        %511 = vmatpush.msra.mxu0 %v362
        %512 = vmatpush.msra.mxu0 %v361
        %513 = vmatpush.msra.mxu0 %v360
        %514 = vmatpush.msra.mxu0 %v359
        %515 = vmatpush.msra.mxu0 %v358
        %516 = vmatpush.msra.mxu0 %v357
        %517 = vmatpush.msra.mxu0 %v356
        %518 = vmatpush.msra.mxu0 %v355
        %519 = vmatmul.f32.gmra.mxu0 %v499
        %v520 = vpop.f32.mrf.mxu0
        %v521 = vadd.f32 %v501, %v520
        %522 = vdwg.mxu0
        %523 = vmatpush.msra.mxu0 %v407
        %524 = vmatpush.msra.mxu0 %v406
        %525 = vmatpush.msra.mxu0 %v405
        %526 = vmatpush.msra.mxu0 %v404
        %527 = vmatpush.msra.mxu0 %v403
        %528 = vmatpush.msra.mxu0 %v402
        %529 = vmatpush.msra.mxu0 %v401
        %530 = vmatpush.msra.mxu0 %v400
        %531 = vmatpush.msra.mxu0 %v399
        %532 = vmatpush.msra.mxu0 %v398
        %533 = vmatpush.msra.mxu0 %v397
        %534 = vmatpush.msra.mxu0 %v396
        %535 = vmatpush.msra.mxu0 %v395
        %536 = vmatpush.msra.mxu0 %v394
        %537 = vmatpush.msra.mxu0 %v393
        %538 = vmatpush.msra.mxu0 %v392
        %539 = vmatmul.f32.gmra.mxu0 %v500
        %v540 = vpop.f32.mrf.mxu0
        %v541 = vadd.f32 %v502, %v540
        %542 = vdwg.mxu0
        %v543 = vtanh.pop %v521
        %v544 = vtanh.pop %v541
        %545 = vst [vmem:[%s220] sm:$0xff] %v543
        %546 = vst [vmem:[%s220 + $0x8] sm:$0xff] %v544
        %s547 = sand.u32 %s95, 1
        %s548 = scalar_lea.sflag [#allocation4], %s547
        %s549 = sand.u32 %s95, 1
        %s550 = smul.addr %s549, 16
        %s551 = scalar_lea.vmem [#allocation8], %s550
        // Predicated region
        $region45: #{tpu_custom_call.1} parent=31 // pred_check
          %p552 = pneg %p105
        $region46: #{tpu_custom_call.1} parent=31 // pred_check_branch
          %554 = sbr.rel (%p552) target = $region48
        $region47: #{tpu_custom_call.1} parent=31 // pred_region
          %s555 = smul.u32 2, %s19
          %557 = vsyncadd %s548, 0
          %s558 = smul.addr %s555, 8
          %s559 = scalar_lea.hbm %s3, %s558
          %s560 = sshll.u32 %s551, 4
          %s561 = int_to_ptr.vmem [resolvable:$true] %s560
          %s562 = sshll.u32 %s559, 4
          %s563 = int_to_ptr.hbm [resolvable:$true] %s562
          %568 = dma.vmem_to_hbm [thread:$0]  %s561, 256, %s563, %s548, 128, 128, 8
        $region48: #{tpu_custom_call.1} parent=31 // pred_fallthru
          _
      $region32: #{tpu_custom_call.1} parent=5 // pred_fallthru
        _
      %p569 = scmp.le.s32.totalorder 2, %s14
      // Predicated region
      $region49: #{tpu_custom_call.1} parent=5 // pred_check
        %p570 = pneg %p569
      $region50: #{tpu_custom_call.1} parent=5 // pred_check_branch
        %572 = sbr.rel (%p570) target = $region52
      $region51: #{tpu_custom_call.1} parent=5 // pred_region
        %s573 = ssub.s32 %s14, 2
        // Predicated region
        $region53: #{tpu_custom_call.1} parent=51 // pred_check
          %p574 = pneg %p111
        $region54: #{tpu_custom_call.1} parent=51 // pred_check_branch
          %576 = sbr.rel (%p574) target = $region56
        $region55: #{tpu_custom_call.1} parent=51 // pred_region
          %s577 = sand.u32 %s96, 1
          %s578 = scalar_lea.sflag [#allocation4], %s577
          %s579 = sand.u32 %s96, 1
          %s580 = smul.addr %s579, 16
          %s581 = scalar_lea.vmem [#allocation8], %s580
          %583 = dma.done %s578, 256
        $region56: #{tpu_custom_call.1} parent=51 // pred_fallthru
          _
      $region52: #{tpu_custom_call.1} parent=5 // pred_fallthru
        _
    $region6: #{tpu_custom_call.1} parent=1 // loop_footer
      %s18 = sadd.s32 1, %s14
    $region7: #{tpu_custom_call.1} parent=1 // loop_footer_branch
      %13 = sbr.rel target = $region3
    $region8: #{tpu_custom_call.1} parent=1 // loop_exit
      _
    %584 = vsyncpa [#allocation3], 1
    %s585 = scalar_lea.sflag [#allocation3], 1
    %586 = vsyncpa %s585, 1
    %587 = vsyncpa [#allocation6], 1
    %588 = vsyncpa [#allocation4], 1
    %s589 = scalar_lea.sflag [#allocation4], 1
    %590 = vsyncpa %s589, 1

</llo_original>
